<compile_context>
chip_gen: v5e
topology: v5e:2x2
jax: 0.10.0
libtpu: 0.0.40
codegen_flags: <defaults>
</compile_context>

<pallas_src>
import jax
import jax.numpy as jnp
import numpy as np
from jax import lax
from jax.experimental import pallas as pl
from jax.experimental.pallas import tpu as pltpu


def _shift_rows(v, delta):
    """Return A with A[r, :] = v[r + delta, :], zero where r + delta is out of range.

    Uses an XLU sublane rotate (pltpu.roll) + a VPU select; no VMEM traffic.
    `delta` is a static Python int (+1 or -1 here).
    """
    R = v.shape[0]
    rolled = pltpu.roll(v, (-delta) % R, 0)                 # rolled[r] = v[(r+delta) mod R]
    rows = lax.broadcasted_iota(jnp.int32, v.shape, 0)
    valid = (rows >= -delta) if delta < 0 else (rows < R - delta)
    return jnp.where(valid, rolled, jnp.zeros_like(rolled))


def conv_block_kernel(x_ref, w1_ref, s1_ref, t1_ref, w2_ref, s2_ref, t2_ref,
                      o_ref, lhs1_ref, lhs2_ref):
    """One grid step = one image (leading N dim squeezed by the BlockSpec).

    x_ref   : (H, W*Cin)             lane-packed input rows
    w1_ref  : (3*W*Cin, W*Cout)      K-stacked banded conv1 weights (kh-major)
    s1/t1   : (1, W*Cout)            folded BN1 (+bias1) affine, tiled across W
    w2_ref  : (3*W*Cout, W*Cout)     K-stacked banded conv2 weights
    s2/t2   : (1, W*Cout)            folded BN2 (+bias2) affine, tiled across W
    o_ref   : (H, W*Cout)            lane-dense (128) packed output
    lhs1_ref: (H, 3*W*Cin)  VMEM     concatenated-tap LHS for conv1
    lhs2_ref: (H, 3*W*Cout) VMEM     concatenated-tap LHS for conv2
    """
    H, WCin = x_ref.shape
    WCout = o_ref.shape[-1]

    # ---- conv1: assemble [row-1 | row | row+1] along lanes, ONE matmul ----
    x = x_ref[...]
    lhs1_ref[:, 0 * WCin:1 * WCin] = _shift_rows(x, -1)     # kh = 0 tap
    lhs1_ref[:, 1 * WCin:2 * WCin] = x                      # kh = 1 tap
    lhs1_ref[:, 2 * WCin:3 * WCin] = _shift_rows(x, +1)     # kh = 2 tap
    acc1 = jnp.dot(lhs1_ref[...], w1_ref[...],
                   preferred_element_type=jnp.float32)      # (H, W*Cout)
    y1 = jnp.maximum(acc1 * s1_ref[...] + t1_ref[...], 0.0)  # folded BN + ReLU

    # ---- conv2: same pattern on the vreg-resident intermediate ----
    lhs2_ref[:, 0 * WCout:1 * WCout] = _shift_rows(y1, -1)
    lhs2_ref[:, 1 * WCout:2 * WCout] = y1
    lhs2_ref[:, 2 * WCout:3 * WCout] = _shift_rows(y1, +1)
    acc2 = jnp.dot(lhs2_ref[...], w2_ref[...],
                   preferred_element_type=jnp.float32)
    y2 = jnp.maximum(acc2 * s2_ref[...] + t2_ref[...], 0.0)

    # lane-dense, unmasked full-width store
    o_ref[...] = y2.astype(o_ref.dtype)


def conv_block_pallas(x_packed, w1_stack, s1t, t1t, w2_stack, s2t, t2t):
    """x_packed: (N, H, W*Cin) f32. Returns (N, H, W*Cout) f32 (lane-packed)."""
    N, H, WCin = x_packed.shape
    WCout = w1_stack.shape[-1]

    grid_spec = pltpu.PrefetchScalarGridSpec(
        num_scalar_prefetch=0,
        grid=(N,),  # one image per step; "parallel" lets v7x use both TCs
        in_specs=[
            pl.BlockSpec((None, H, WCin), lambda i: (i, 0, 0)),
            # constant index_maps: weights/affines stay resident, no re-DMA per step
            pl.BlockSpec(w1_stack.shape, lambda i: (0, 0)),
            pl.BlockSpec((1, WCout), lambda i: (0, 0)),
            pl.BlockSpec((1, WCout), lambda i: (0, 0)),
            pl.BlockSpec(w2_stack.shape, lambda i: (0, 0)),
            pl.BlockSpec((1, WCout), lambda i: (0, 0)),
            pl.BlockSpec((1, WCout), lambda i: (0, 0)),
        ],
        out_specs=pl.BlockSpec((None, H, WCout), lambda i: (i, 0, 0)),
        scratch_shapes=[
            pltpu.VMEM((H, 3 * WCin), jnp.float32),   # conv1 concatenated-tap LHS
            pltpu.VMEM((H, 3 * WCout), jnp.float32),  # conv2 concatenated-tap LHS
        ],
    )

    return pl.pallas_call(
        conv_block_kernel,
        out_shape=jax.ShapeDtypeStruct((N, H, WCout), jnp.float32),
        grid_spec=grid_spec,
        compiler_params=pltpu.CompilerParams(
            dimension_semantics=("parallel",)),
    )(x_packed, w1_stack, s1t, t1t, w2_stack, s2t, t2t)


def build_stacked_band_matrix(w_hwio, W):
    """Fold kw taps + channel contraction + W zero-padding of a 3x3 'SAME' conv
    into ONE K-stacked block-banded matrix of shape (3*W*Cin, W*Cout):

      M[kh*W*Cin + s*Cin + ci, w*Cout + co] = w_hwio[kh, kw, ci, co]
        where s = w + kw - 1 (zero elsewhere -> implicit W zero padding).

    Row blocks (kh) match the lane order of the in-kernel LHS concatenation
    [row-1 | row | row+1].
    """
    Kh, Kw, Cin, Cout = w_hwio.shape
    src = jnp.arange(W)[:, None]   # input column  s
    dst = jnp.arange(W)[None, :]   # output column w
    mats = []
    for kh in range(Kh):
        m4 = jnp.zeros((W, Cin, W, Cout), jnp.float32)
        for kw in range(Kw):
            mask = (src == dst + (kw - 1)).astype(jnp.float32)          # (W, W)
            m4 = m4 + mask[:, None, :, None] * w_hwio[kh, kw][None, :, None, :]
        mats.append(m4.reshape(W * Cin, W * Cout))
    return jnp.concatenate(mats, axis=0)                                # (3*W*Cin, W*Cout)


def fold_bn(bias, gamma, beta, mean, var, eps=1e-5):
    """Fold conv bias + BatchNorm (inference) into per-channel scale/shift."""
    s = gamma / jnp.sqrt(var + eps)
    t = (bias - mean) * s + beta
    return s.astype(jnp.float32), t.astype(jnp.float32)


def tile_affine(v, W):
    """Per-channel (Cout,) -> lane-packed (1, W*Cout) matching column w*Cout+co."""
    return jnp.tile(v, W).reshape(1, -1)


def reference_conv_block(x_nhwc, w1_hwio, s1, t1, w2_hwio, s2, t2):
    """Pure-JAX reference (lax conv, highest precision) with folded-BN semantics."""
    dn = lax.conv_dimension_numbers(x_nhwc.shape, w1_hwio.shape,
                                    ("NHWC", "HWIO", "NHWC"))
    y = lax.conv_general_dilated(x_nhwc, w1_hwio, (1, 1), "SAME",
                                 dimension_numbers=dn,
                                 precision=lax.Precision.HIGHEST)
    y = jnp.maximum(y * s1.reshape(1, 1, 1, -1) + t1.reshape(1, 1, 1, -1), 0.0)
    dn2 = lax.conv_dimension_numbers(y.shape, w2_hwio.shape,
                                     ("NHWC", "HWIO", "NHWC"))
    y = lax.conv_general_dilated(y, w2_hwio, (1, 1), "SAME",
                                 dimension_numbers=dn2,
                                 precision=lax.Precision.HIGHEST)
    y = jnp.maximum(y * s2.reshape(1, 1, 1, -1) + t2.reshape(1, 1, 1, -1), 0.0)
    return y


if __name__ == "__main__":
    # Small shapes consistent with the module: N=2, ch_in=4, ch_out=8, 16x16 spatial.
    N, Cin, Cout, H, W = 2, 4, 8, 16, 16

    key = jax.random.PRNGKey(0)
    ks = jax.random.split(key, 11)

    # Deterministic synthetic parameters (PyTorch shapes, then re-laid out).
    x_nchw = jax.random.normal(ks[0], (N, Cin, H, W), jnp.float32)

    w1_oihw = jax.random.normal(ks[1], (Cout, Cin, 3, 3), jnp.float32) * 0.2
    b1 = jax.random.normal(ks[2], (Cout,), jnp.float32) * 0.1
    g1 = 1.0 + 0.1 * jax.random.normal(ks[3], (Cout,), jnp.float32)
    be1 = 0.1 * jax.random.normal(ks[4], (Cout,), jnp.float32)
    rm1 = 0.1 * jax.random.normal(ks[5], (Cout,), jnp.float32)
    rv1 = jnp.abs(jax.random.normal(ks[6], (Cout,), jnp.float32)) + 0.5

    w2_oihw = jax.random.normal(ks[7], (Cout, Cout, 3, 3), jnp.float32) * 0.2
    b2 = jax.random.normal(ks[8], (Cout,), jnp.float32) * 0.1
    g2 = 1.0 + 0.1 * jax.random.normal(ks[9], (Cout,), jnp.float32)
    be2 = 0.1 * jax.random.normal(ks[10], (Cout,), jnp.float32)
    rm2 = jnp.zeros((Cout,), jnp.float32)
    rv2 = jnp.ones((Cout,), jnp.float32)

    # Re-layout: NCHW -> NHWC -> lane-packed rows; OIHW -> HWIO -> stacked banded matrices.
    x_nhwc = jnp.transpose(x_nchw, (0, 2, 3, 1))
    x_packed = x_nhwc.reshape(N, H, W * Cin)

    w1_hwio = jnp.transpose(w1_oihw, (2, 3, 1, 0))              # (3,3,Cin,Cout)
    w2_hwio = jnp.transpose(w2_oihw, (2, 3, 1, 0))              # (3,3,Cout,Cout)
    w1_stack = build_stacked_band_matrix(w1_hwio, W)            # (3*W*Cin,  W*Cout)
    w2_stack = build_stacked_band_matrix(w2_hwio, W)            # (3*W*Cout, W*Cout)

    s1, t1 = fold_bn(b1, g1, be1, rm1, rv1)
    s2, t2 = fold_bn(b2, g2, be2, rm2, rv2)
    s1t, t1t = tile_affine(s1, W), tile_affine(t1, W)
    s2t, t2t = tile_affine(s2, W), tile_affine(t2, W)

    out_packed = conv_block_pallas(x_packed, w1_stack, s1t, t1t,
                                   w2_stack, s2t, t2t)
    out_packed = jax.block_until_ready(out_packed)
    out = out_packed.reshape(N, H, W, Cout)

    ref = reference_conv_block(x_nhwc, w1_hwio, s1, t1, w2_hwio, s2, t2)
    ref = jax.block_until_ready(ref)

    assert out.shape == (N, H, W, Cout)
    np.testing.assert_allclose(np.asarray(out), np.asarray(ref),
                               rtol=5e-4, atol=5e-4)
    print("KERNEL_OK")
</pallas_src>

<mosaic_0001>
module attributes {stable_mosaic.version = 11 : i64} {
  func.func @conv_block_kernel(%arg0: i32, %arg1: memref<1x16x64xf32, #tpu.memory_space<vmem>>, %arg2: memref<192x128xf32, #tpu.memory_space<vmem>>, %arg3: memref<1x128xf32, #tpu.memory_space<vmem>>, %arg4: memref<1x128xf32, #tpu.memory_space<vmem>>, %arg5: memref<384x128xf32, #tpu.memory_space<vmem>>, %arg6: memref<1x128xf32, #tpu.memory_space<vmem>>, %arg7: memref<1x128xf32, #tpu.memory_space<vmem>>, %arg8: memref<1x16x128xf32, #tpu.memory_space<vmem>>, %arg9: memref<16x192xf32, #tpu.memory_space<vmem>>, %arg10: memref<16x384xf32, #tpu.memory_space<vmem>>) attributes {dimension_semantics = [#tpu.dimension_semantics<parallel>], iteration_bounds = array<i64: 2>, scalar_prefetch = 0 : i64, scratch_operands = 2 : i64, tpu.core_type = #tpu.core_type<tc>, window_params = [{transform_indices = @transform_0, window_bounds = array<i64: 1, 16, 64>}, {pipeline_mode = #tpu.pipeline_mode<synchronous>, transform_indices = @transform_1, window_bounds = array<i64: 192, 128>}, {pipeline_mode = #tpu.pipeline_mode<synchronous>, transform_indices = @transform_2, window_bounds = array<i64: 1, 128>}, {pipeline_mode = #tpu.pipeline_mode<synchronous>, transform_indices = @transform_3, window_bounds = array<i64: 1, 128>}, {pipeline_mode = #tpu.pipeline_mode<synchronous>, transform_indices = @transform_4, window_bounds = array<i64: 384, 128>}, {pipeline_mode = #tpu.pipeline_mode<synchronous>, transform_indices = @transform_5, window_bounds = array<i64: 1, 128>}, {pipeline_mode = #tpu.pipeline_mode<synchronous>, transform_indices = @transform_6, window_bounds = array<i64: 1, 128>}, {transform_indices = @transform_7, window_bounds = array<i64: 1, 16, 128>}]} {
    %c0 = arith.constant 0 : index
    %c0_0 = arith.constant 0 : index
    %c0_1 = arith.constant 0 : index
    %0 = vector.load %arg1[%c0, %c0_0, %c0_1] : memref<1x16x64xf32, #tpu.memory_space<vmem>>, vector<1x16x64xf32>
    %1 = vector.shape_cast %0 : vector<1x16x64xf32> to vector<16x64xf32>
    %c1_i32 = arith.constant 1 : i32
    %2 = tpu.dynamic_rotate %1 by %c1_i32 dim 0 : vector<16x64xf32>, i32 -> vector<16x64xf32>
    %3 = tpu.iota {dimensions = array<i32: 0>} : vector<16x64xi32>
    %c1_i32_2 = arith.constant 1 : i32
    %4 = vector.broadcast %c1_i32_2 : i32 to vector<16x64xi32>
    %5 = arith.cmpi sge, %3, %4 : vector<16x64xi32>
    %cst = arith.constant 0.000000e+00 : f32
    %6 = vector.broadcast %cst : f32 to vector<16x64xf32>
    %7 = arith.select %5, %2, %6 : vector<16x64xi1>, vector<16x64xf32>
    %c0_3 = arith.constant 0 : index
    %c0_4 = arith.constant 0 : index
    %8 = vector.load %arg9[%c0_3, %c0_4] : memref<16x192xf32, #tpu.memory_space<vmem>>, vector<16x64xf32>
    tpu.vector_store %arg9[%c0_3, %c0_4], %7 {strides = array<i32>} : memref<16x192xf32, #tpu.memory_space<vmem>>, vector<16x64xf32>,
    %c0_5 = arith.constant 0 : index
    %c64 = arith.constant 64 : index
    %9 = vector.load %arg9[%c0_5, %c64] : memref<16x192xf32, #tpu.memory_space<vmem>>, vector<16x64xf32>
    tpu.vector_store %arg9[%c0_5, %c64], %1 {strides = array<i32>} : memref<16x192xf32, #tpu.memory_space<vmem>>, vector<16x64xf32>,
    %c15_i32 = arith.constant 15 : i32
    %10 = tpu.dynamic_rotate %1 by %c15_i32 dim 0 : vector<16x64xf32>, i32 -> vector<16x64xf32>
    %11 = tpu.iota {dimensions = array<i32: 0>} : vector<16x64xi32>
    %c15_i32_6 = arith.constant 15 : i32
    %12 = vector.broadcast %c15_i32_6 : i32 to vector<16x64xi32>
    %13 = arith.cmpi slt, %11, %12 : vector<16x64xi32>
    %cst_7 = arith.constant 0.000000e+00 : f32
    %14 = vector.broadcast %cst_7 : f32 to vector<16x64xf32>
    %15 = arith.select %13, %10, %14 : vector<16x64xi1>, vector<16x64xf32>
    %c0_8 = arith.constant 0 : index
    %c128 = arith.constant 128 : index
    %16 = vector.load %arg9[%c0_8, %c128] : memref<16x192xf32, #tpu.memory_space<vmem>>, vector<16x64xf32>
    tpu.vector_store %arg9[%c0_8, %c128], %15 {strides = array<i32>} : memref<16x192xf32, #tpu.memory_space<vmem>>, vector<16x64xf32>,
    %c0_9 = arith.constant 0 : index
    %c0_10 = arith.constant 0 : index
    %17 = vector.load %arg9[%c0_9, %c0_10] : memref<16x192xf32, #tpu.memory_space<vmem>>, vector<16x192xf32>
    %c0_11 = arith.constant 0 : index
    %c0_12 = arith.constant 0 : index
    %18 = vector.load %arg2[%c0_11, %c0_12] : memref<192x128xf32, #tpu.memory_space<vmem>>, vector<192x128xf32>
    %cst_13 = arith.constant dense<0.000000e+00> : vector<16x128xf32>
    %19 = tpu.matmul %17, %18, %cst_13 {dimension_numbers = #tpu.dot_dimension_numbers<[1], [0], [0], [1], [0, 0, 1, 1], [], []>} : vector<16x192xf32>, vector<192x128xf32>, vector<16x128xf32> -> vector<16x128xf32>
    %c0_14 = arith.constant 0 : index
    %c0_15 = arith.constant 0 : index
    %20 = vector.load %arg3[%c0_14, %c0_15] : memref<1x128xf32, #tpu.memory_space<vmem>>, vector<1x128xf32>
    %21 = vector.broadcast %20 : vector<1x128xf32> to vector<16x128xf32>
    %22 = arith.mulf %19, %21 : vector<16x128xf32>
    %c0_16 = arith.constant 0 : index
    %c0_17 = arith.constant 0 : index
    %23 = vector.load %arg4[%c0_16, %c0_17] : memref<1x128xf32, #tpu.memory_space<vmem>>, vector<1x128xf32>
    %24 = vector.broadcast %23 : vector<1x128xf32> to vector<16x128xf32>
    %25 = arith.addf %22, %24 : vector<16x128xf32>
    %cst_18 = arith.constant 0.000000e+00 : f32
    %26 = vector.broadcast %cst_18 : f32 to vector<16x128xf32>
    %27 = arith.maximumf %25, %26 : vector<16x128xf32>
    %c1_i32_19 = arith.constant 1 : i32
    %28 = tpu.dynamic_rotate %27 by %c1_i32_19 dim 0 : vector<16x128xf32>, i32 -> vector<16x128xf32>
    %29 = tpu.iota {dimensions = array<i32: 0>} : vector<16x128xi32>
    %c1_i32_20 = arith.constant 1 : i32
    %30 = vector.broadcast %c1_i32_20 : i32 to vector<16x128xi32>
    %31 = arith.cmpi sge, %29, %30 : vector<16x128xi32>
    %cst_21 = arith.constant 0.000000e+00 : f32
    %32 = vector.broadcast %cst_21 : f32 to vector<16x128xf32>
    %33 = arith.select %31, %28, %32 : vector<16x128xi1>, vector<16x128xf32>
    %c0_22 = arith.constant 0 : index
    %c0_23 = arith.constant 0 : index
    %34 = vector.load %arg10[%c0_22, %c0_23] : memref<16x384xf32, #tpu.memory_space<vmem>>, vector<16x128xf32>
    tpu.vector_store %arg10[%c0_22, %c0_23], %33 {strides = array<i32>} : memref<16x384xf32, #tpu.memory_space<vmem>>, vector<16x128xf32>,
    %c0_24 = arith.constant 0 : index
    %c128_25 = arith.constant 128 : index
    %35 = vector.load %arg10[%c0_24, %c128_25] : memref<16x384xf32, #tpu.memory_space<vmem>>, vector<16x128xf32>
    tpu.vector_store %arg10[%c0_24, %c128_25], %27 {strides = array<i32>} : memref<16x384xf32, #tpu.memory_space<vmem>>, vector<16x128xf32>,
    %c15_i32_26 = arith.constant 15 : i32
    %36 = tpu.dynamic_rotate %27 by %c15_i32_26 dim 0 : vector<16x128xf32>, i32 -> vector<16x128xf32>
    %37 = tpu.iota {dimensions = array<i32: 0>} : vector<16x128xi32>
    %c15_i32_27 = arith.constant 15 : i32
    %38 = vector.broadcast %c15_i32_27 : i32 to vector<16x128xi32>
    %39 = arith.cmpi slt, %37, %38 : vector<16x128xi32>
    %cst_28 = arith.constant 0.000000e+00 : f32
    %40 = vector.broadcast %cst_28 : f32 to vector<16x128xf32>
    %41 = arith.select %39, %36, %40 : vector<16x128xi1>, vector<16x128xf32>
    %c0_29 = arith.constant 0 : index
    %c256 = arith.constant 256 : index
    %42 = vector.load %arg10[%c0_29, %c256] : memref<16x384xf32, #tpu.memory_space<vmem>>, vector<16x128xf32>
    tpu.vector_store %arg10[%c0_29, %c256], %41 {strides = array<i32>} : memref<16x384xf32, #tpu.memory_space<vmem>>, vector<16x128xf32>,
    %c0_30 = arith.constant 0 : index
    %c0_31 = arith.constant 0 : index
    %43 = vector.load %arg10[%c0_30, %c0_31] : memref<16x384xf32, #tpu.memory_space<vmem>>, vector<16x384xf32>
    %c0_32 = arith.constant 0 : index
    %c0_33 = arith.constant 0 : index
    %44 = vector.load %arg5[%c0_32, %c0_33] : memref<384x128xf32, #tpu.memory_space<vmem>>, vector<384x128xf32>
    %cst_34 = arith.constant dense<0.000000e+00> : vector<16x128xf32>
    %45 = tpu.matmul %43, %44, %cst_34 {dimension_numbers = #tpu.dot_dimension_numbers<[1], [0], [0], [1], [0, 0, 1, 1], [], []>} : vector<16x384xf32>, vector<384x128xf32>, vector<16x128xf32> -> vector<16x128xf32>
    %c0_35 = arith.constant 0 : index
    %c0_36 = arith.constant 0 : index
    %46 = vector.load %arg6[%c0_35, %c0_36] : memref<1x128xf32, #tpu.memory_space<vmem>>, vector<1x128xf32>
    %47 = vector.broadcast %46 : vector<1x128xf32> to vector<16x128xf32>
    %48 = arith.mulf %45, %47 : vector<16x128xf32>
    %c0_37 = arith.constant 0 : index
    %c0_38 = arith.constant 0 : index
    %49 = vector.load %arg7[%c0_37, %c0_38] : memref<1x128xf32, #tpu.memory_space<vmem>>, vector<1x128xf32>
    %50 = vector.broadcast %49 : vector<1x128xf32> to vector<16x128xf32>
    %51 = arith.addf %48, %50 : vector<16x128xf32>
    %cst_39 = arith.constant 0.000000e+00 : f32
    %52 = vector.broadcast %cst_39 : f32 to vector<16x128xf32>
    %53 = arith.maximumf %51, %52 : vector<16x128xf32>
    %c0_40 = arith.constant 0 : index
    %c0_41 = arith.constant 0 : index
    %c0_42 = arith.constant 0 : index
    %54 = vector.load %arg8[%c0_40, %c0_41, %c0_42] : memref<1x16x128xf32, #tpu.memory_space<vmem>>, vector<1x16x128xf32>
    %55 = vector.shape_cast %54 : vector<1x16x128xf32> to vector<16x128xf32>
    %56 = vector.shape_cast %53 : vector<16x128xf32> to vector<1x16x128xf32>
    tpu.vector_store %arg8[%c0_40, %c0_41, %c0_42], %56 {strides = array<i32>} : memref<1x16x128xf32, #tpu.memory_space<vmem>>, vector<1x16x128xf32>,
    return
  }
  func.func @transform_0(%arg0: i32) -> (i32, i32, i32) {
    %c0_i32 = arith.constant 0 : i32
    %c0_i32_0 = arith.constant 0 : i32
    %c0_i32_1 = arith.constant 0 : i32
    return %arg0, %c0_i32, %c0_i32_0 : i32, i32, i32
  }
  func.func @transform_1(%arg0: i32) -> (i32, i32) {
    %c0_i32 = arith.constant 0 : i32
    %c0_i32_0 = arith.constant 0 : i32
    %c0_i32_1 = arith.constant 0 : i32
    return %c0_i32, %c0_i32_0 : i32, i32
  }
  func.func @transform_2(%arg0: i32) -> (i32, i32) {
    %c0_i32 = arith.constant 0 : i32
    %c0_i32_0 = arith.constant 0 : i32
    %c0_i32_1 = arith.constant 0 : i32
    return %c0_i32, %c0_i32_0 : i32, i32
  }
  func.func @transform_3(%arg0: i32) -> (i32, i32) {
    %c0_i32 = arith.constant 0 : i32
    %c0_i32_0 = arith.constant 0 : i32
    %c0_i32_1 = arith.constant 0 : i32
    return %c0_i32, %c0_i32_0 : i32, i32
  }
  func.func @transform_4(%arg0: i32) -> (i32, i32) {
    %c0_i32 = arith.constant 0 : i32
    %c0_i32_0 = arith.constant 0 : i32
    %c0_i32_1 = arith.constant 0 : i32
    return %c0_i32, %c0_i32_0 : i32, i32
  }
  func.func @transform_5(%arg0: i32) -> (i32, i32) {
    %c0_i32 = arith.constant 0 : i32
    %c0_i32_0 = arith.constant 0 : i32
    %c0_i32_1 = arith.constant 0 : i32
    return %c0_i32, %c0_i32_0 : i32, i32
  }
  func.func @transform_6(%arg0: i32) -> (i32, i32) {
    %c0_i32 = arith.constant 0 : i32
    %c0_i32_0 = arith.constant 0 : i32
    %c0_i32_1 = arith.constant 0 : i32
    return %c0_i32, %c0_i32_0 : i32, i32
  }
  func.func @transform_7(%arg0: i32) -> (i32, i32, i32) {
    %c0_i32 = arith.constant 0 : i32
    %c0_i32_0 = arith.constant 0 : i32
    %c0_i32_1 = arith.constant 0 : i32
    return %arg0, %c0_i32, %c0_i32_0 : i32, i32, i32
  }
}

</mosaic_0001>

<llo_original>
// kernel: tpu_custom_call.1
$region0: #{tpu_custom_call.1}
  #allocation0 [shape = 'u32[]', space=smem, size = 0x4, offset = 0x4, fixed_abs, tag = 'smem constant byte address 0x4 - core index']
  #allocation1 [shape = 'u32[72,128]{1,0:T(1,128)}', space=vmem, size = 0x9000, scoped, tag = 'internal scratch']
  #allocation2 [shape = 'f32[16,192]{1,0:T(8,128)}', space=vmem, size = 0x4000, scoped, tag = 'scratch operand']
  #allocation3 [shape = 'f32[16,384]{1,0:T(8,128)}', space=vmem, size = 0x6000, scoped, tag = 'scratch operand']
  %s0 = inlined_call_operand.hbm [shape: f32[2,16,64], index: 0, kind: input, shape index: {}]
  %s1 = inlined_call_operand.hbm [shape: f32[192,128], index: 1, kind: input, shape index: {}]
  %s2 = inlined_call_operand.vmem [shape: f32[1,128], index: 2, kind: input, shape index: {}]
  %s3 = inlined_call_operand.vmem [shape: f32[1,128], index: 3, kind: input, shape index: {}]
  %s4 = inlined_call_operand.hbm [shape: f32[384,128], index: 4, kind: input, shape index: {}]
  %s5 = inlined_call_operand.vmem [shape: f32[1,128], index: 5, kind: input, shape index: {}]
  %s6 = inlined_call_operand.vmem [shape: f32[1,128], index: 6, kind: input, shape index: {}]
  %s7 = inlined_call_operand.hbm [shape: f32[2,16,128], index: 7, kind: output, shape index: {}]
  %s8 = sld [smem:[#allocation0]]
  $region73: #{tpu_custom_call.1} parent=0
    _
  %s10 = ssub.s32 1, %s8
  %s11 = scalar_select 0, %s10, %s8
  $region1: #{tpu_custom_call.1} parent=0
    #allocation4 [shape = 'u8[16384]{0}', space=vmem, size = 0x4000, scoped, tag = 'input window, operand 0']
    #allocation5 [shape = 's32[2]{0}', space=sflag, size = 0x8, scoped, tag = 'scoped memory for tpu_custom_call.1']
    #allocation6 [shape = 's32[2]{0}', space=sflag, size = 0x8, scoped, tag = 'scoped memory for tpu_custom_call.1']
    #allocation7 [shape = 'u8[98304]{0}', space=vmem, size = 0x18000, scoped, tag = 'input window, operand 1, single buffered']
    #allocation8 [shape = 's32[1]{0}', space=sflag, size = 0x4, scoped, tag = 'scoped memory for tpu_custom_call.1']
    #allocation9 [shape = 'u8[196608]{0}', space=vmem, size = 0x30000, scoped, tag = 'input window, operand 4, single buffered']
    #allocation10 [shape = 'u8[16384]{0}', space=vmem, size = 0x4000, scoped, tag = 'output window, operand 0']
    %12 = vsyncpa [#allocation5], 0
    %s13 = scalar_lea.sflag [#allocation5], 1
    %14 = vsyncpa %s13, 0
    %15 = vsyncpa [#allocation8], 0
    %16 = vsyncpa [#allocation6], 0
    %s17 = scalar_lea.sflag [#allocation6], 1
    %18 = vsyncpa %s17, 0
    loop: start=0, step=1, limit=4
    $region2: #{tpu_custom_call.1} parent=1 // loop_pre_header
      _
    $region3: #{tpu_custom_call.1} parent=1 // loop_header
      %s20 = sphi 0, %s24
      %p21 = scmp.ge.s32.totalorder %s20, 4
      %s30 = sphi 0, %s32
      %s33 = sphi 0, %s30
      %s34 = sphi 0, %s33
      %s50 = sphi 0, %s34
      %s54 = sphi 0, %s54
      %s56 = sphi 0, %s54
      %s57 = sphi 0, %s56
      %s71 = sphi 0, %s57
      %s75 = sphi 0, %s75
      %s77 = sphi 0, %s75
      %s78 = sphi 0, %s77
      %s92 = sphi 0, %s78
      %s96 = sphi 0, %s96
      %s98 = sphi 0, %s96
      %s99 = sphi 0, %s98
      %s113 = sphi 0, %s99
      %s117 = sphi 0, %s117
      %s119 = sphi 0, %s117
      %s120 = sphi 0, %s119
      %s134 = sphi 0, %s120
      %s138 = sphi 0, %s138
      %s140 = sphi 0, %s138
      %s141 = sphi 0, %s140
      %s155 = sphi 0, %s141
      %s159 = sphi 0, %s159
      %s161 = sphi 0, %s159
      %s162 = sphi 0, %s161
      %s176 = sphi 0, %s162
      %s182 = sphi 0, %s184
      %s185 = sphi 0, %s182
      %s186 = sphi 0, %s185
      %s202 = sphi 0, %s186
    $region4: #{tpu_custom_call.1} parent=1 // loop_header_branch
      %23 = sbr.rel (%p21) target = $region8
    $region5: #{tpu_custom_call.1} parent=1 // loop_body
      %s25 = ssub.s32 %s20, 1
      %s26 = ssub.s32 %s20, 2
      %s27 = sadd.s32 %s20, 1
      %s28 = ssub.s32 %s20, %s27
      %p29 = scmp.eq.s32.totalorder %s28, 0
      %s31 = sadd.s32 %s30, 1
      %s32 = scalar_select %p29, %s30, %s31
      %p35 = pneg %p29
      %p36 = scmp.eq.s32.totalorder %s20, 1
      %p37 = por %p35, %p36
      %p38 = scmp.ne.s32.totalorder %s30, %s33
      %p39 = scmp.eq.s32.totalorder %s20, 0
      %p40 = por %p38, %p39
      %p41 = scmp.ne.s32.totalorder %s30, %s33
      %p42 = scmp.eq.s32.totalorder %s25, 1
      %p43 = por %p41, %p42
      %p44 = scmp.ne.s32.totalorder %s33, %s34
      %p45 = scmp.eq.s32.totalorder %s25, 0
      %p46 = por %p44, %p45
      %p47 = scmp.ne.s32.totalorder %s33, %s34
      %p48 = scmp.eq.s32.totalorder %s26, 1
      %p49 = por %p47, %p48
      %p51 = scmp.ne.s32.totalorder %s34, %s50
      %p52 = scmp.eq.s32.totalorder %s26, 0
      %p53 = por %p51, %p52
      %s55 = sadd.s32 %s54, 1
      %p58 = scmp.eq.s32.totalorder %s20, 1
      %p59 = scmp.ne.s32.totalorder %s54, %s56
      %p60 = scmp.eq.s32.totalorder %s20, 0
      %p61 = por %p59, %p60
      %p62 = scmp.ne.s32.totalorder %s54, %s56
      %p63 = scmp.eq.s32.totalorder %s25, 1
      %p64 = por %p62, %p63
      %p65 = scmp.ne.s32.totalorder %s56, %s57
      %p66 = scmp.eq.s32.totalorder %s25, 0
      %p67 = por %p65, %p66
      %p68 = scmp.ne.s32.totalorder %s56, %s57
      %p69 = scmp.eq.s32.totalorder %s26, 1
      %p70 = por %p68, %p69
      %p72 = scmp.ne.s32.totalorder %s57, %s71
      %p73 = scmp.eq.s32.totalorder %s26, 0
      %p74 = por %p72, %p73
      %s76 = sadd.s32 %s75, 1
      %p79 = scmp.eq.s32.totalorder %s20, 1
      %p80 = scmp.ne.s32.totalorder %s75, %s77
      %p81 = scmp.eq.s32.totalorder %s20, 0
      %p82 = por %p80, %p81
      %p83 = scmp.ne.s32.totalorder %s75, %s77
      %p84 = scmp.eq.s32.totalorder %s25, 1
      %p85 = por %p83, %p84
      %p86 = scmp.ne.s32.totalorder %s77, %s78
      %p87 = scmp.eq.s32.totalorder %s25, 0
      %p88 = por %p86, %p87
      %p89 = scmp.ne.s32.totalorder %s77, %s78
      %p90 = scmp.eq.s32.totalorder %s26, 1
      %p91 = por %p89, %p90
      %p93 = scmp.ne.s32.totalorder %s78, %s92
      %p94 = scmp.eq.s32.totalorder %s26, 0
      %p95 = por %p93, %p94
      %s97 = sadd.s32 %s96, 1
      %p100 = scmp.eq.s32.totalorder %s20, 1
      %p101 = scmp.ne.s32.totalorder %s96, %s98
      %p102 = scmp.eq.s32.totalorder %s20, 0
      %p103 = por %p101, %p102
      %p104 = scmp.ne.s32.totalorder %s96, %s98
      %p105 = scmp.eq.s32.totalorder %s25, 1
      %p106 = por %p104, %p105
      %p107 = scmp.ne.s32.totalorder %s98, %s99
      %p108 = scmp.eq.s32.totalorder %s25, 0
      %p109 = por %p107, %p108
      %p110 = scmp.ne.s32.totalorder %s98, %s99
      %p111 = scmp.eq.s32.totalorder %s26, 1
      %p112 = por %p110, %p111
      %p114 = scmp.ne.s32.totalorder %s99, %s113
      %p115 = scmp.eq.s32.totalorder %s26, 0
      %p116 = por %p114, %p115
      %s118 = sadd.s32 %s117, 1
      %p121 = scmp.eq.s32.totalorder %s20, 1
      %p122 = scmp.ne.s32.totalorder %s117, %s119
      %p123 = scmp.eq.s32.totalorder %s20, 0
      %p124 = por %p122, %p123
      %p125 = scmp.ne.s32.totalorder %s117, %s119
      %p126 = scmp.eq.s32.totalorder %s25, 1
      %p127 = por %p125, %p126
      %p128 = scmp.ne.s32.totalorder %s119, %s120
      %p129 = scmp.eq.s32.totalorder %s25, 0
      %p130 = por %p128, %p129
      %p131 = scmp.ne.s32.totalorder %s119, %s120
      %p132 = scmp.eq.s32.totalorder %s26, 1
      %p133 = por %p131, %p132
      %p135 = scmp.ne.s32.totalorder %s120, %s134
      %p136 = scmp.eq.s32.totalorder %s26, 0
      %p137 = por %p135, %p136
      %s139 = sadd.s32 %s138, 1
      %p142 = scmp.eq.s32.totalorder %s20, 1
      %p143 = scmp.ne.s32.totalorder %s138, %s140
      %p144 = scmp.eq.s32.totalorder %s20, 0
      %p145 = por %p143, %p144
      %p146 = scmp.ne.s32.totalorder %s138, %s140
      %p147 = scmp.eq.s32.totalorder %s25, 1
      %p148 = por %p146, %p147
      %p149 = scmp.ne.s32.totalorder %s140, %s141
      %p150 = scmp.eq.s32.totalorder %s25, 0
      %p151 = por %p149, %p150
      %p152 = scmp.ne.s32.totalorder %s140, %s141
      %p153 = scmp.eq.s32.totalorder %s26, 1
      %p154 = por %p152, %p153
      %p156 = scmp.ne.s32.totalorder %s141, %s155
      %p157 = scmp.eq.s32.totalorder %s26, 0
      %p158 = por %p156, %p157
      %s160 = sadd.s32 %s159, 1
      %p163 = scmp.eq.s32.totalorder %s20, 1
      %p164 = scmp.ne.s32.totalorder %s159, %s161
      %p165 = scmp.eq.s32.totalorder %s20, 0
      %p166 = por %p164, %p165
      %p167 = scmp.ne.s32.totalorder %s159, %s161
      %p168 = scmp.eq.s32.totalorder %s25, 1
      %p169 = por %p167, %p168
      %p170 = scmp.ne.s32.totalorder %s161, %s162
      %p171 = scmp.eq.s32.totalorder %s25, 0
      %p172 = por %p170, %p171
      %p173 = scmp.ne.s32.totalorder %s161, %s162
      %p174 = scmp.eq.s32.totalorder %s26, 1
      %p175 = por %p173, %p174
      %p177 = scmp.ne.s32.totalorder %s162, %s176
      %p178 = scmp.eq.s32.totalorder %s26, 0
      %p179 = por %p177, %p178
      %s180 = ssub.s32 %s20, %s27
      %p181 = scmp.eq.s32.totalorder %s180, 0
      %s183 = sadd.s32 %s182, 1
      %s184 = scalar_select %p181, %s182, %s183
      %p187 = pneg %p181
      %p188 = scmp.eq.s32.totalorder %s20, 1
      %p189 = por %p187, %p188
      %p190 = scmp.ne.s32.totalorder %s182, %s185
      %p191 = scmp.eq.s32.totalorder %s20, 0
      %p192 = por %p190, %p191
      %p193 = scmp.ne.s32.totalorder %s182, %s185
      %p194 = scmp.eq.s32.totalorder %s25, 1
      %p195 = por %p193, %p194
      %p196 = scmp.ne.s32.totalorder %s185, %s186
      %p197 = scmp.eq.s32.totalorder %s25, 0
      %p198 = por %p196, %p197
      %p199 = scmp.ne.s32.totalorder %s185, %s186
      %p200 = scmp.eq.s32.totalorder %s26, 1
      %p201 = por %p199, %p200
      %p203 = scmp.ne.s32.totalorder %s186, %s202
      %p204 = scmp.eq.s32.totalorder %s26, 0
      %p205 = por %p203, %p204
      %p206 = scmp.le.s32.totalorder 1, %s20
      %p207 = scmp.lt.s32.totalorder %s20, 3
      %p208 = pnand %p206, %p207
      %p209 = pneg %p208
      // Predicated region
      $region9: #{tpu_custom_call.1} parent=5 // pred_check
        _
      $region10: #{tpu_custom_call.1} parent=5 // pred_check_branch
        %211 = sbr.rel (%p208) target = $region12
      $region11: #{tpu_custom_call.1} parent=5 // pred_region
        %s212 = ssub.s32 %s20, 1
        // Predicated region
        $region13: #{tpu_custom_call.1} parent=11 // pred_check
          %p213 = pneg %p67
        $region14: #{tpu_custom_call.1} parent=11 // pred_check_branch
          %215 = sbr.rel (%p213) target = $region16
        $region15: #{tpu_custom_call.1} parent=11 // pred_region
          %217 = vsyncadd [#allocation8], 0
          %s218 = sshll.u32 %s1, 4
          %s219 = int_to_ptr.hbm [resolvable:$true] %s218
          %s220 = sshll.u32 [#allocation7], 4
          %s221 = int_to_ptr.vmem [resolvable:$true] %s220
          %226 = dma.hbm_to_vmem [thread:$0]  %s219, 3072, %s221, [#allocation8], 128, 128, 8
        $region16: #{tpu_custom_call.1} parent=11 // pred_fallthru
          _
        // Predicated region
        $region17: #{tpu_custom_call.1} parent=11 // pred_check
          %p227 = pneg %p88
        $region18: #{tpu_custom_call.1} parent=11 // pred_check_branch
          %229 = sbr.rel (%p227) target = $region20
        $region19: #{tpu_custom_call.1} parent=11 // pred_region
          _
        $region20: #{tpu_custom_call.1} parent=11 // pred_fallthru
          _
        // Predicated region
        $region21: #{tpu_custom_call.1} parent=11 // pred_check
          %p230 = pneg %p109
        $region22: #{tpu_custom_call.1} parent=11 // pred_check_branch
          %232 = sbr.rel (%p230) target = $region24
        $region23: #{tpu_custom_call.1} parent=11 // pred_region
          _
        $region24: #{tpu_custom_call.1} parent=11 // pred_fallthru
          _
        // Predicated region
        $region25: #{tpu_custom_call.1} parent=11 // pred_check
          %p233 = pneg %p130
        $region26: #{tpu_custom_call.1} parent=11 // pred_check_branch
          %235 = sbr.rel (%p233) target = $region28
        $region27: #{tpu_custom_call.1} parent=11 // pred_region
          %237 = vsyncadd [#allocation8], 0
          %s238 = sshll.u32 %s4, 4
          %s239 = int_to_ptr.hbm [resolvable:$true] %s238
          %s240 = sshll.u32 [#allocation9], 4
          %s241 = int_to_ptr.vmem [resolvable:$true] %s240
          %246 = dma.hbm_to_vmem [thread:$0]  %s239, 6144, %s241, [#allocation8], 128, 128, 8
        $region28: #{tpu_custom_call.1} parent=11 // pred_fallthru
          _
        // Predicated region
        $region29: #{tpu_custom_call.1} parent=11 // pred_check
          %p247 = pneg %p151
        $region30: #{tpu_custom_call.1} parent=11 // pred_check_branch
          %249 = sbr.rel (%p247) target = $region32
        $region31: #{tpu_custom_call.1} parent=11 // pred_region
          _
        $region32: #{tpu_custom_call.1} parent=11 // pred_fallthru
          _
        // Predicated region
        $region33: #{tpu_custom_call.1} parent=11 // pred_check
          %p250 = pneg %p172
        $region34: #{tpu_custom_call.1} parent=11 // pred_check_branch
          %252 = sbr.rel (%p250) target = $region36
        $region35: #{tpu_custom_call.1} parent=11 // pred_region
          _
        $region36: #{tpu_custom_call.1} parent=11 // pred_fallthru
          _
      $region12: #{tpu_custom_call.1} parent=5 // pred_fallthru
        _
      %p253 = scmp.lt.s32.totalorder %s20, 2
      // Predicated region
      $region37: #{tpu_custom_call.1} parent=5 // pred_check
        %p254 = pneg %p253
      $region38: #{tpu_custom_call.1} parent=5 // pred_check_branch
        %256 = sbr.rel (%p254) target = $region40
      $region39: #{tpu_custom_call.1} parent=5 // pred_region
        // Predicated region
        $region41: #{tpu_custom_call.1} parent=39 // pred_check
          %p257 = pneg %p40
        $region42: #{tpu_custom_call.1} parent=39 // pred_check_branch
          %259 = sbr.rel (%p257) target = $region44
        $region43: #{tpu_custom_call.1} parent=39 // pred_region
          %s260 = sand.u32 %s30, 1
          %s261 = scalar_lea.sflag [#allocation5], %s260
          %s262 = sand.u32 %s30, 1
          %s263 = smul.addr %s262, 16
          %s264 = scalar_lea.vmem [#allocation4], %s263
          %266 = vsyncadd %s261, 0
          %s267 = smul.addr %s20, 2
          %s268 = smul.addr %s267, 8
          %s269 = scalar_lea.hbm %s0, %s268
          %s270 = sshll.u32 %s269, 4
          %s271 = int_to_ptr.hbm [resolvable:$true] %s270
          %s272 = sshll.u32 %s264, 4
          %s273 = int_to_ptr.vmem [resolvable:$true] %s272
          %278 = dma.hbm_to_vmem [thread:$0]  %s271, 256, %s273, %s261, 128, 128, 8
        $region44: #{tpu_custom_call.1} parent=39 // pred_fallthru
          _
      $region40: #{tpu_custom_call.1} parent=5 // pred_fallthru
        _
      %p279 = scmp.le.s32.totalorder 1, %s20
      %p280 = scmp.lt.s32.totalorder %s20, 3
      %p281 = pnand %p279, %p280
      %p282 = pneg %p281
      // Predicated region
      $region45: #{tpu_custom_call.1} parent=5 // pred_check
        _
      $region46: #{tpu_custom_call.1} parent=5 // pred_check_branch
        %284 = sbr.rel (%p281) target = $region48
      $region47: #{tpu_custom_call.1} parent=5 // pred_region
        %s285 = ssub.s32 %s20, 1
        %s286 = sand.u32 %s33, 1
        %s287 = scalar_lea.sflag [#allocation5], %s286
        %s288 = sand.u32 %s33, 1
        %s289 = smul.addr %s288, 16
        %s290 = scalar_lea.vmem [#allocation4], %s289
        // Predicated region
        $region49: #{tpu_custom_call.1} parent=47 // pred_check
          %p291 = pneg %p46
        $region50: #{tpu_custom_call.1} parent=47 // pred_check_branch
          %293 = sbr.rel (%p291) target = $region52
        $region51: #{tpu_custom_call.1} parent=47 // pred_region
          %295 = dma.done %s287, 256
        $region52: #{tpu_custom_call.1} parent=47 // pred_fallthru
          _
        // Predicated region
        $region53: #{tpu_custom_call.1} parent=47 // pred_check
          %p296 = pneg %p67
        $region54: #{tpu_custom_call.1} parent=47 // pred_check_branch
          %298 = sbr.rel (%p296) target = $region56
        $region55: #{tpu_custom_call.1} parent=47 // pred_region
          %300 = dma.done [#allocation8], 3072
        $region56: #{tpu_custom_call.1} parent=47 // pred_fallthru
          _
        // Predicated region
        $region57: #{tpu_custom_call.1} parent=47 // pred_check
          %p301 = pneg %p130
        $region58: #{tpu_custom_call.1} parent=47 // pred_check_branch
          %303 = sbr.rel (%p301) target = $region60
        $region59: #{tpu_custom_call.1} parent=47 // pred_region
          %305 = dma.done [#allocation8], 6144
        $region60: #{tpu_custom_call.1} parent=47 // pred_fallthru
          _
        %s306 = sand.u32 %s33, 1
        %s307 = scalar_lea.sflag [#allocation5], %s306
        %s308 = sand.u32 %s33, 1
        %s309 = smul.addr %s308, 16
        %s310 = scalar_lea.vmem [#allocation4], %s309
        %p311 = pneg %p46
        %p312 = pneg %p43
        %p313 = pneg %p67
        %p314 = pneg %p64
        %p315 = pneg %p88
        %p316 = pneg %p85
        %p317 = pneg %p109
        %p318 = pneg %p106
        %p319 = pneg %p130
        %p320 = pneg %p127
        %p321 = pneg %p151
        %p322 = pneg %p148
        %p323 = pneg %p172
        %p324 = pneg %p169
        %p325 = pneg %p198
        %p326 = pneg %p195
        %s327 = sand.u32 %s185, 1
        %s328 = scalar_lea.sflag [#allocation6], %s327
        %s329 = sand.u32 %s185, 1
        %s330 = smul.addr %s329, 16
        %s331 = scalar_lea.vmem [#allocation10], %s330
        %v332 = vld [vmem:[%s290] sm:$0xff]
        %v333 = vld [vmem:[%s290 + $0x8] sm:$0xff]
        %v334 = vrot.slane %v332, 7
        %v335 = vrot.slane %v333, 7
        %v336 = vlaneseq
        %v337 = vshrl.u32 %v336, 7
        %vm338 = vcmp.lt.s32.totalorder %v337, 1
        %v339 = vsel %vm338, %v334, %v335
        %v340 = vsel %vm338, %v335, %v334
        %v341 = vadd.s32 %v337, 8
        %vm342 = vcmp.ge.s32.totalorder %v337, 1
        %vm343 = vcmp.ge.s32.totalorder %v341, 1
        %v344 = vsel %vm342, %v340, 0.0
        %v345 = vsel %vm343, %v339, 0.0
        %vm346 = vcmask 523264
        %347 = vst.msk [vmem:[#allocation2] sm:$0xff] %vm346, %v344
        %348 = vst.msk [vmem:[#allocation2 + $0x10] sm:$0xff] %vm346, %v345
        %351 = vrot.lane.b32.xlu0 %v332, 64
        %v352 = vpop.permute.xlu0 %351
        %353 = vrot.lane.b32.xlu0 %v333, 64
        %v354 = vpop.permute.xlu0 %353
        %vm357 = vcmask 1048064
        %358 = vst.msk [vmem:[#allocation2] sm:$0xff] %vm357, %v352
        %359 = vst.msk [vmem:[#allocation2 + $0x10] sm:$0xff] %vm357, %v354
        %v360 = vrot.slane %v332, 1
        %v361 = vrot.slane %v333, 1
        %vm362 = vcmp.lt.s32.totalorder %v337, 7
        %v363 = vsel %vm362, %v360, %v361
        %v364 = vsel %vm362, %v361, %v360
        %vm365 = vcmp.lt.s32.totalorder %v337, 15
        %vm366 = vcmp.lt.s32.totalorder %v341, 15
        %v367 = vsel %vm365, %v363, 0.0
        %v368 = vsel %vm366, %v364, 0.0
        %369 = vst.msk [vmem:[#allocation2 + $0x8] sm:$0xff] %vm346, %v367
        %370 = vst.msk [vmem:[#allocation2 + $0x18] sm:$0xff] %vm346, %v368
        %v371 = vld [vmem:[#allocation2] sm:$0xff]
        %v372 = vld [vmem:[#allocation2 + $0x8] sm:$0xff]
        %v373 = vld [vmem:[#allocation2 + $0x10] sm:$0xff]
        %v374 = vld [vmem:[#allocation2 + $0x18] sm:$0xff]
        %v375 = vld [vmem:[#allocation7] sm:$0xff]
        %v376 = vld [vmem:[#allocation7 + $0x8] sm:$0xff]
        %v377 = vld [vmem:[#allocation7 + $0x10] sm:$0xff]
        %v378 = vld [vmem:[#allocation7 + $0x18] sm:$0xff]
        %v379 = vld [vmem:[#allocation7 + $0x20] sm:$0xff]
        %v380 = vld [vmem:[#allocation7 + $0x28] sm:$0xff]
        %v381 = vld [vmem:[#allocation7 + $0x30] sm:$0xff]
        %v382 = vld [vmem:[#allocation7 + $0x38] sm:$0xff]
        %v383 = vld [vmem:[#allocation7 + $0x40] sm:$0xff]
        %v384 = vld [vmem:[#allocation7 + $0x48] sm:$0xff]
        %v385 = vld [vmem:[#allocation7 + $0x50] sm:$0xff]
        %v386 = vld [vmem:[#allocation7 + $0x58] sm:$0xff]
        %v387 = vld [vmem:[#allocation7 + $0x60] sm:$0xff]
        %v388 = vld [vmem:[#allocation7 + $0x68] sm:$0xff]
        %v389 = vld [vmem:[#allocation7 + $0x70] sm:$0xff]
        %v390 = vld [vmem:[#allocation7 + $0x78] sm:$0xff]
        %v391 = vld [vmem:[#allocation7 + $0x80] sm:$0xff]
        %v392 = vld [vmem:[#allocation7 + $0x88] sm:$0xff]
        %v393 = vld [vmem:[#allocation7 + $0x90] sm:$0xff]
        %v394 = vld [vmem:[#allocation7 + $0x98] sm:$0xff]
        %v395 = vld [vmem:[#allocation7 + $0xa0] sm:$0xff]
        %v396 = vld [vmem:[#allocation7 + $0xa8] sm:$0xff]
        %v397 = vld [vmem:[#allocation7 + $0xb0] sm:$0xff]
        %v398 = vld [vmem:[#allocation7 + $0xb8] sm:$0xff]
        %v400 = vsel %vm346, %v372, 0
        %v403 = vsel %vm346, %v374, 0
        %405 = vmatpush.msra.mxu0 %v390
        %406 = vmatpush.msra.mxu0 %v389
        %407 = vmatpush.msra.mxu0 %v388
        %408 = vmatpush.msra.mxu0 %v387
        %409 = vmatpush.msra.mxu0 %v386
        %410 = vmatpush.msra.mxu0 %v385
        %411 = vmatpush.msra.mxu0 %v384
        %412 = vmatpush.msra.mxu0 %v383
        %413 = vmatpush.msra.mxu0 %v382
        %414 = vmatpush.msra.mxu0 %v381
        %415 = vmatpush.msra.mxu0 %v380
        %416 = vmatpush.msra.mxu0 %v379
        %417 = vmatpush.msra.mxu0 %v378
        %418 = vmatpush.msra.mxu0 %v377
        %419 = vmatpush.msra.mxu0 %v376
        %420 = vmatpush.msra.mxu0 %v375
        %421 = vmatmul.f32.gmra.mxu0 %v371
        %v422 = vpop.f32.mrf.mxu0
        %v423 = vadd.f32 0.0, %v422
        %424 = vmatmul.f32.gmra.mxu0 %v373
        %v425 = vpop.f32.mrf.mxu0
        %v426 = vadd.f32 0.0, %v425
        %427 = vdwg.mxu0
        %428 = vmatpush.msra.mxu0 0.0
        %429 = vmatpush.msra.mxu0 0.0
        %430 = vmatpush.msra.mxu0 0.0
        %431 = vmatpush.msra.mxu0 0.0
        %432 = vmatpush.msra.mxu0 0.0
        %433 = vmatpush.msra.mxu0 0.0
        %434 = vmatpush.msra.mxu0 0.0
        %435 = vmatpush.msra.mxu0 0.0
        %436 = vmatpush.msra.mxu0 %v398
        %437 = vmatpush.msra.mxu0 %v397
        %438 = vmatpush.msra.mxu0 %v396
        %439 = vmatpush.msra.mxu0 %v395
        %440 = vmatpush.msra.mxu0 %v394
        %441 = vmatpush.msra.mxu0 %v393
        %442 = vmatpush.msra.mxu0 %v392
        %443 = vmatpush.msra.mxu0 %v391
        %444 = vmatmul.f32.gmra.mxu0 %v400
        %v445 = vpop.f32.mrf.mxu0
        %v446 = vadd.f32 %v423, %v445
        %447 = vmatmul.f32.gmra.mxu0 %v403
        %v448 = vpop.f32.mrf.mxu0
        %v449 = vadd.f32 %v426, %v448
        %450 = vdwg.mxu0
        %v451 = vld [vmem:[%s2] sm:$0x1]
        %v453 = vperm.slane %v451, 0
        %v455 = vmul.f32 %v446, %v453
        %v456 = vmul.f32 %v449, %v453
        %v457 = vld [vmem:[%s3] sm:$0x1]
        %v459 = vperm.slane %v457, 0
        %v461 = vadd.f32 %v455, %v459
        %v462 = vadd.f32 %v456, %v459
        %v463 = vmax.f32 %v461, 0.0
        %v464 = vmax.f32 %v462, 0.0
        %v465 = vrot.slane %v463, 7
        %v466 = vrot.slane %v464, 7
        %v467 = vsel %vm338, %v465, %v466
        %v468 = vsel %vm338, %v466, %v465
        %v469 = vsel %vm342, %v468, 0.0
        %v470 = vsel %vm343, %v467, 0.0
        %471 = vst [vmem:[#allocation3] sm:$0xff] %v469
        %472 = vst [vmem:[#allocation3 + $0x18] sm:$0xff] %v470
        %473 = vst [vmem:[#allocation3 + $0x8] sm:$0xff] %v463
        %474 = vst [vmem:[#allocation3 + $0x20] sm:$0xff] %v464
        %v475 = vrot.slane %v463, 1
        %v476 = vrot.slane %v464, 1
        %v477 = vsel %vm362, %v475, %v476
        %v478 = vsel %vm362, %v476, %v475
        %v479 = vsel %vm365, %v477, 0.0
        %v480 = vsel %vm366, %v478, 0.0
        %481 = vst [vmem:[#allocation3 + $0x10] sm:$0xff] %v479
        %482 = vst [vmem:[#allocation3 + $0x28] sm:$0xff] %v480
        %v483 = vld [vmem:[#allocation3] sm:$0xff]
        %v484 = vld [vmem:[#allocation3 + $0x8] sm:$0xff]
        %v485 = vld [vmem:[#allocation3 + $0x10] sm:$0xff]
        %v486 = vld [vmem:[#allocation3 + $0x18] sm:$0xff]
        %v487 = vld [vmem:[#allocation3 + $0x20] sm:$0xff]
        %v488 = vld [vmem:[#allocation3 + $0x28] sm:$0xff]
        %v489 = vld [vmem:[#allocation9] sm:$0xff]
        %v490 = vld [vmem:[#allocation9 + $0x8] sm:$0xff]
        %v491 = vld [vmem:[#allocation9 + $0x10] sm:$0xff]
        %v492 = vld [vmem:[#allocation9 + $0x18] sm:$0xff]
        %v493 = vld [vmem:[#allocation9 + $0x20] sm:$0xff]
        %v494 = vld [vmem:[#allocation9 + $0x28] sm:$0xff]
        %v495 = vld [vmem:[#allocation9 + $0x30] sm:$0xff]
        %v496 = vld [vmem:[#allocation9 + $0x38] sm:$0xff]
        %v497 = vld [vmem:[#allocation9 + $0x40] sm:$0xff]
        %v498 = vld [vmem:[#allocation9 + $0x48] sm:$0xff]
        %v499 = vld [vmem:[#allocation9 + $0x50] sm:$0xff]
        %v500 = vld [vmem:[#allocation9 + $0x58] sm:$0xff]
        %v501 = vld [vmem:[#allocation9 + $0x60] sm:$0xff]
        %v502 = vld [vmem:[#allocation9 + $0x68] sm:$0xff]
        %v503 = vld [vmem:[#allocation9 + $0x70] sm:$0xff]
        %v504 = vld [vmem:[#allocation9 + $0x78] sm:$0xff]
        %v505 = vld [vmem:[#allocation9 + $0x80] sm:$0xff]
        %v506 = vld [vmem:[#allocation9 + $0x88] sm:$0xff]
        %v507 = vld [vmem:[#allocation9 + $0x90] sm:$0xff]
        %v508 = vld [vmem:[#allocation9 + $0x98] sm:$0xff]
        %v509 = vld [vmem:[#allocation9 + $0xa0] sm:$0xff]
        %v510 = vld [vmem:[#allocation9 + $0xa8] sm:$0xff]
        %v511 = vld [vmem:[#allocation9 + $0xb0] sm:$0xff]
        %v512 = vld [vmem:[#allocation9 + $0xb8] sm:$0xff]
        %v513 = vld [vmem:[#allocation9 + $0xc0] sm:$0xff]
        %v514 = vld [vmem:[#allocation9 + $0xc8] sm:$0xff]
        %v515 = vld [vmem:[#allocation9 + $0xd0] sm:$0xff]
        %v516 = vld [vmem:[#allocation9 + $0xd8] sm:$0xff]
        %v517 = vld [vmem:[#allocation9 + $0xe0] sm:$0xff]
        %v518 = vld [vmem:[#allocation9 + $0xe8] sm:$0xff]
        %v519 = vld [vmem:[#allocation9 + $0xf0] sm:$0xff]
        %v520 = vld [vmem:[#allocation9 + $0xf8] sm:$0xff]
        %v521 = vld [vmem:[#allocation9 + $0x100] sm:$0xff]
        %v522 = vld [vmem:[#allocation9 + $0x108] sm:$0xff]
        %v523 = vld [vmem:[#allocation9 + $0x110] sm:$0xff]
        %v524 = vld [vmem:[#allocation9 + $0x118] sm:$0xff]
        %v525 = vld [vmem:[#allocation9 + $0x120] sm:$0xff]
        %v526 = vld [vmem:[#allocation9 + $0x128] sm:$0xff]
        %v527 = vld [vmem:[#allocation9 + $0x130] sm:$0xff]
        %v528 = vld [vmem:[#allocation9 + $0x138] sm:$0xff]
        %v529 = vld [vmem:[#allocation9 + $0x140] sm:$0xff]
        %v530 = vld [vmem:[#allocation9 + $0x148] sm:$0xff]
        %v531 = vld [vmem:[#allocation9 + $0x150] sm:$0xff]
        %v532 = vld [vmem:[#allocation9 + $0x158] sm:$0xff]
        %v533 = vld [vmem:[#allocation9 + $0x160] sm:$0xff]
        %v534 = vld [vmem:[#allocation9 + $0x168] sm:$0xff]
        %v535 = vld [vmem:[#allocation9 + $0x170] sm:$0xff]
        %v536 = vld [vmem:[#allocation9 + $0x178] sm:$0xff]
        %537 = vmatpush.msra.mxu0 %v504
        %538 = vmatpush.msra.mxu0 %v503
        %539 = vmatpush.msra.mxu0 %v502
        %540 = vmatpush.msra.mxu0 %v501
        %541 = vmatpush.msra.mxu0 %v500
        %542 = vmatpush.msra.mxu0 %v499
        %543 = vmatpush.msra.mxu0 %v498
        %544 = vmatpush.msra.mxu0 %v497
        %545 = vmatpush.msra.mxu0 %v496
        %546 = vmatpush.msra.mxu0 %v495
        %547 = vmatpush.msra.mxu0 %v494
        %548 = vmatpush.msra.mxu0 %v493
        %549 = vmatpush.msra.mxu0 %v492
        %550 = vmatpush.msra.mxu0 %v491
        %551 = vmatpush.msra.mxu0 %v490
        %552 = vmatpush.msra.mxu0 %v489
        %553 = vmatmul.f32.gmra.mxu0 %v483
        %v554 = vpop.f32.mrf.mxu0
        %v555 = vadd.f32 0.0, %v554
        %556 = vmatmul.f32.gmra.mxu0 %v486
        %v557 = vpop.f32.mrf.mxu0
        %v558 = vadd.f32 0.0, %v557
        %559 = vdwg.mxu0
        %560 = vmatpush.msra.mxu0 %v520
        %561 = vmatpush.msra.mxu0 %v519
        %562 = vmatpush.msra.mxu0 %v518
        %563 = vmatpush.msra.mxu0 %v517
        %564 = vmatpush.msra.mxu0 %v516
        %565 = vmatpush.msra.mxu0 %v515
        %566 = vmatpush.msra.mxu0 %v514
        %567 = vmatpush.msra.mxu0 %v513
        %568 = vmatpush.msra.mxu0 %v512
        %569 = vmatpush.msra.mxu0 %v511
        %570 = vmatpush.msra.mxu0 %v510
        %571 = vmatpush.msra.mxu0 %v509
        %572 = vmatpush.msra.mxu0 %v508
        %573 = vmatpush.msra.mxu0 %v507
        %574 = vmatpush.msra.mxu0 %v506
        %575 = vmatpush.msra.mxu0 %v505
        %576 = vmatmul.f32.gmra.mxu0 %v484
        %v577 = vpop.f32.mrf.mxu0
        %v578 = vadd.f32 %v555, %v577
        %579 = vmatmul.f32.gmra.mxu0 %v487
        %v580 = vpop.f32.mrf.mxu0
        %v581 = vadd.f32 %v558, %v580
        %582 = vdwg.mxu0
        %583 = vmatpush.msra.mxu0 %v536
        %584 = vmatpush.msra.mxu0 %v535
        %585 = vmatpush.msra.mxu0 %v534
        %586 = vmatpush.msra.mxu0 %v533
        %587 = vmatpush.msra.mxu0 %v532
        %588 = vmatpush.msra.mxu0 %v531
        %589 = vmatpush.msra.mxu0 %v530
        %590 = vmatpush.msra.mxu0 %v529
        %591 = vmatpush.msra.mxu0 %v528
        %592 = vmatpush.msra.mxu0 %v527
        %593 = vmatpush.msra.mxu0 %v526
        %594 = vmatpush.msra.mxu0 %v525
        %595 = vmatpush.msra.mxu0 %v524
        %596 = vmatpush.msra.mxu0 %v523
        %597 = vmatpush.msra.mxu0 %v522
        %598 = vmatpush.msra.mxu0 %v521
        %599 = vmatmul.f32.gmra.mxu0 %v485
        %v600 = vpop.f32.mrf.mxu0
        %v601 = vadd.f32 %v578, %v600
        %602 = vmatmul.f32.gmra.mxu0 %v488
        %v603 = vpop.f32.mrf.mxu0
        %v604 = vadd.f32 %v581, %v603
        %605 = vdwg.mxu0
        %v606 = vld [vmem:[%s5] sm:$0x1]
        %v608 = vperm.slane %v606, 0
        %v610 = vmul.f32 %v601, %v608
        %v611 = vmul.f32 %v604, %v608
        %v612 = vld [vmem:[%s6] sm:$0x1]
        %v614 = vperm.slane %v612, 0
        %v616 = vadd.f32 %v610, %v614
        %v617 = vadd.f32 %v611, %v614
        %v618 = vmax.f32 %v616, 0.0
        %v619 = vmax.f32 %v617, 0.0
        %620 = vst [vmem:[%s331] sm:$0xff] %v618
        %621 = vst [vmem:[%s331 + $0x8] sm:$0xff] %v619
        %s622 = sand.u32 %s185, 1
        %s623 = scalar_lea.sflag [#allocation6], %s622
        %s624 = sand.u32 %s185, 1
        %s625 = smul.addr %s624, 16
        %s626 = scalar_lea.vmem [#allocation10], %s625
        // Predicated region
        $region61: #{tpu_custom_call.1} parent=47 // pred_check
          %p627 = pneg %p195
        $region62: #{tpu_custom_call.1} parent=47 // pred_check_branch
          %629 = sbr.rel (%p627) target = $region64
        $region63: #{tpu_custom_call.1} parent=47 // pred_region
          %631 = vsyncadd %s623, 0
          %s632 = smul.addr %s25, 2
          %s633 = smul.addr %s632, 8
          %s634 = scalar_lea.hbm %s7, %s633
          %s635 = sshll.u32 %s626, 4
          %s636 = int_to_ptr.vmem [resolvable:$true] %s635
          %s637 = sshll.u32 %s634, 4
          %s638 = int_to_ptr.hbm [resolvable:$true] %s637
          %643 = dma.vmem_to_hbm [thread:$0]  %s636, 256, %s638, %s623, 128, 128, 8
        $region64: #{tpu_custom_call.1} parent=47 // pred_fallthru
          _
      $region48: #{tpu_custom_call.1} parent=5 // pred_fallthru
        _
      %p644 = scmp.le.s32.totalorder 2, %s20
      // Predicated region
      $region65: #{tpu_custom_call.1} parent=5 // pred_check
        %p645 = pneg %p644
      $region66: #{tpu_custom_call.1} parent=5 // pred_check_branch
        %647 = sbr.rel (%p645) target = $region68
      $region67: #{tpu_custom_call.1} parent=5 // pred_region
        %s648 = ssub.s32 %s20, 2
        // Predicated region
        $region69: #{tpu_custom_call.1} parent=67 // pred_check
          %p649 = pneg %p201
        $region70: #{tpu_custom_call.1} parent=67 // pred_check_branch
          %651 = sbr.rel (%p649) target = $region72
        $region71: #{tpu_custom_call.1} parent=67 // pred_region
          %s652 = sand.u32 %s186, 1
          %s653 = scalar_lea.sflag [#allocation6], %s652
          %s654 = sand.u32 %s186, 1
          %s655 = smul.addr %s654, 16
          %s656 = scalar_lea.vmem [#allocation10], %s655
          %658 = dma.done %s653, 256
        $region72: #{tpu_custom_call.1} parent=67 // pred_fallthru
          _
      $region68: #{tpu_custom_call.1} parent=5 // pred_fallthru
        _
    $region6: #{tpu_custom_call.1} parent=1 // loop_footer
      %s24 = sadd.s32 1, %s20
    $region7: #{tpu_custom_call.1} parent=1 // loop_footer_branch
      %19 = sbr.rel target = $region3
    $region8: #{tpu_custom_call.1} parent=1 // loop_exit
      _
    %659 = vsyncpa [#allocation5], 1
    %s660 = scalar_lea.sflag [#allocation5], 1
    %661 = vsyncpa %s660, 1
    %662 = vsyncpa [#allocation8], 1
    %663 = vsyncpa [#allocation6], 1
    %s664 = scalar_lea.sflag [#allocation6], 1
    %665 = vsyncpa %s664, 1

</llo_original>
